<compile_context>
chip_gen: v5e
topology: v5e:2x2
jax: 0.10.0
libtpu: 0.0.40
codegen_flags: <defaults>
</compile_context>

<pallas_src>
import jax
import jax.numpy as jnp
from jax.experimental import pallas as pl
from jax.experimental.pallas import tpu as pltpu


def _round_up(x, m):
    return (x + m - 1) // m * m


def _vmem_capacity_bytes():
    """Physical VMEM of the attached TPU; conservative 64 MiB (v7x) fallback."""
    try:
        info = pltpu.get_tpu_info()
        cap = getattr(info, "vmem_capacity_bytes", None)
        if cap:
            return int(cap)
    except Exception:
        pass
    return 64 * 1024 * 1024


def _decoder_kernel(x_ref, w_ref, b_ref, o_ref):
    # x_ref: (TM, L), w_ref: (L, TN), b_ref: (1, TN), o_ref: (TM, TN)
    acc = jnp.dot(x_ref[...], w_ref[...], preferred_element_type=jnp.float32)
    o_ref[...] = (acc + b_ref[...].astype(jnp.float32)).astype(o_ref.dtype)


def decoder_forward(x, w_t, b, *, tm=256, tn=512):
    """Forward of Decoder: x @ w_t + b.

    x   : (..., latent_dim)
    w_t : (latent_dim, input_shape)   (pre-transposed nn.Linear weight)
    b   : (input_shape,)
    """
    orig_shape = x.shape
    L = orig_shape[-1]
    Lw, D = w_t.shape
    assert L == Lw, "latent dim mismatch"

    # Flatten any leading dims into the batch (nn.Linear semantics).
    x2 = x.reshape(-1, L)
    B = x2.shape[0]
    itemsize = jnp.dtype(x2.dtype).itemsize

    # dtype-aware sublane packing: 8 rows f32, 16 bf16, 32 int8/fp8.
    sub = 8 * max(1, 4 // itemsize)

    # Per-generation VMEM budget (v5e/v6e: 128 MiB physical, v7x: 64 MiB).
    cap = _vmem_capacity_bytes()
    budget = int(0.70 * cap)
    vmem_cap = int(0.90 * cap)

    b2d = b.reshape(1, D)

    # Requested batch tile (rounded to the packed sublane count).
    tm_req = max(sub, min(_round_up(tm, sub), _round_up(B, sub)))

    # ---------------- Plan A feasibility: weight-resident ----------------
    # Lane-dense weight/output: pad D to a multiple of 128.
    Dp = _round_up(D, 128)
    weight_bytes = (L * Dp + Dp) * itemsize        # resident weight + bias (x1)
    # x / out batch slabs are double-buffered by the pipeline (x2).
    tm_fit = (budget - weight_bytes) // max(1, 2 * (L + Dp) * itemsize)
    tm_fit = (int(tm_fit) // sub) * sub

    if tm_fit >= sub:
        # ---------------- Plan A: full weight + bias stay resident ----------
        tm_a = min(tm_req, tm_fit)
        Bp = _round_up(B, tm_a)

        w_p = jnp.pad(w_t, ((0, 0), (0, Dp - D))) if Dp != D else w_t
        b_p = jnp.pad(b2d, ((0, 0), (0, Dp - D))) if Dp != D else b2d
        x_p = jnp.pad(x2, ((0, Bp - B), (0, 0))) if Bp != B else x2

        grid_b = Bp // tm_a
        # Give v7x's second TensorCore work when the batch grid has one step.
        split_d = grid_b < 2 and Dp >= 256
        if split_d:
            Dp2 = _round_up(Dp, 256)
            if Dp2 != Dp:
                w_p = jnp.pad(w_p, ((0, 0), (0, Dp2 - Dp)))
                b_p = jnp.pad(b_p, ((0, 0), (0, Dp2 - Dp)))
                Dp = Dp2
            tn_a = Dp // 2
            grid = (grid_b, 2)
            in_specs = [
                pl.BlockSpec((tm_a, L), lambda i, j: (i, 0)),
                pl.BlockSpec((L, tn_a), lambda i, j: (0, j)),
                pl.BlockSpec((1, tn_a), lambda i, j: (0, j)),
            ]
            out_specs = pl.BlockSpec((tm_a, tn_a), lambda i, j: (i, j))
            dim_sem = ("parallel", "parallel")
            w_copies = 1  # two half-width buffers == one full weight
        else:
            # Constant-index weight/bias: single-buffer when large so the
            # resident copy only costs ~L*Dp once in VMEM.
            single_buf = weight_bytes >= (8 << 20)
            w_kwargs = dict(pipeline_mode=pl.Buffered(1)) if single_buf else {}
            grid = (grid_b,)
            in_specs = [
                pl.BlockSpec((tm_a, L), lambda i: (i, 0)),
                pl.BlockSpec((L, Dp), lambda i: (0, 0), **w_kwargs),
                pl.BlockSpec((1, Dp), lambda i: (0, 0), **w_kwargs),
            ]
            out_specs = pl.BlockSpec((tm_a, Dp), lambda i: (i, 0))
            dim_sem = ("parallel",)
            w_copies = 1 if single_buf else 2

        out_shape = jax.ShapeDtypeStruct((Bp, Dp), x.dtype)
        args = (x_p, w_p, b_p)
        est_bytes = 2 * tm_a * (L + Dp) * itemsize + w_copies * weight_bytes
        # Weight is read from HBM exactly once.
        hbm_bytes = (Bp * L + L * Dp + Dp + Bp * Dp) * itemsize
    else:
        # ---------------- Plan B: stream (L, tn) weight tiles ----------------
        # Lane-dense tn that divides the 128-padded D exactly (minimal padding,
        # no extra post-kernel slice copy).
        D128 = _round_up(D, 128)
        tn_cap = max(128, min((tn // 128) * 128, D128))
        tn_eff = 128
        t = tn_cap
        while t >= 128:
            if D128 % t == 0:
                tn_eff = t
                break
            t -= 128
        Dp = D128

        # Weight HBM re-reads scale as 1/tm: grow the batch tile to the budget.
        fixed = 2 * (L * tn_eff + tn_eff) * itemsize
        tm_cand = (budget - fixed) // max(1, 2 * (L + tn_eff) * itemsize)
        tm_cand = (int(tm_cand) // sub) * sub
        tm_a = max(sub, min(tm_cand, 1024, _round_up(B, sub)))
        Bp = _round_up(B, tm_a)

        x_p = jnp.pad(x2, ((0, Bp - B), (0, 0))) if Bp != B else x2
        w_p = jnp.pad(w_t, ((0, 0), (0, Dp - D))) if Dp != D else w_t
        b_p = jnp.pad(b2d, ((0, 0), (0, Dp - D))) if Dp != D else b2d

        grid = (Bp // tm_a, Dp // tn_eff)
        in_specs = [
            pl.BlockSpec((tm_a, L), lambda i, j: (i, 0)),
            # TODO(synk): on v5e, sweep pipeline_mode=pl.Buffered(3) on the
            # streamed weight tile to deepen prefetch if VMEM allows.
            pl.BlockSpec((L, tn_eff), lambda i, j: (0, j)),
            pl.BlockSpec((1, tn_eff), lambda i, j: (0, j)),
        ]
        out_specs = pl.BlockSpec((tm_a, tn_eff), lambda i, j: (i, j))
        out_shape = jax.ShapeDtypeStruct((Bp, Dp), x.dtype)
        dim_sem = ("parallel", "parallel")
        args = (x_p, w_p, b_p)
        est_bytes = (2 * (tm_a * L + tm_a * tn_eff)
                     + 2 * (L * tn_eff + tn_eff)) * itemsize
        # Weight re-streamed once per batch tile; x re-read once per D tile.
        hbm_bytes = (Bp * L * (Dp // tn_eff)
                     + L * Dp * (Bp // tm_a)
                     + Dp + Bp * Dp) * itemsize

    cost = pl.CostEstimate(
        flops=2 * Bp * L * Dp,
        transcendentals=0,
        bytes_accessed=int(hbm_bytes),
    )

    # Always set the scoped VMEM limit explicitly (v5e default is only 16 MiB),
    # clamped below the chip's physical VMEM.
    vmem_limit = int(min(max(est_bytes * 1.25, 16 * 1024 * 1024), vmem_cap))

    out = pl.pallas_call(
        _decoder_kernel,
        out_shape=out_shape,
        grid_spec=pltpu.PrefetchScalarGridSpec(
            num_scalar_prefetch=0,
            grid=grid,
            in_specs=in_specs,
            out_specs=out_specs,
        ),
        compiler_params=pltpu.CompilerParams(
            dimension_semantics=dim_sem,
            vmem_limit_bytes=vmem_limit,
        ),
        cost_estimate=cost,
    )(*args)

    if Bp != B or Dp != D:
        out = out[:B, :D]
    return out.reshape(orig_shape[:-1] + (D,))


def make_decoder_params(key, input_shape, latent_dim, dtype=jnp.float32):
    """Deterministic init mimicking nn.Linear's uniform(-1/sqrt(fan_in), ...)."""
    kw, kb = jax.random.split(key)
    bound = 1.0 / jnp.sqrt(jnp.float32(latent_dim))
    # PyTorch stores weight as (out_features, in_features) = (input_shape, latent_dim);
    # we keep it transposed as (latent_dim, input_shape) for the kernel.
    w_t = jax.random.uniform(kw, (latent_dim, input_shape), dtype, -bound, bound)
    b = jax.random.uniform(kb, (input_shape,), dtype, -bound, bound)
    return w_t, b


if __name__ == "__main__":
    key = jax.random.PRNGKey(0)
    k_x, k_p = jax.random.split(key)

    batch = 8
    latent_dim = 32      # latent embedding dimension
    input_shape = 256    # reconstructed vector dimension

    x = jax.random.normal(k_x, (batch, latent_dim), dtype=jnp.float32)
    w_t, b = make_decoder_params(k_p, input_shape, latent_dim)

    out = decoder_forward(x, w_t, b)
    jax.block_until_ready(out)

    # Reference check against plain JAX (same math as nn.Linear forward).
    ref = x @ w_t + b
    assert out.shape == (batch, input_shape)
    assert jnp.allclose(out, ref, atol=1e-5, rtol=1e-5)

    print("KERNEL_OK")
</pallas_src>

<mosaic_0001>
module attributes {stable_mosaic.version = 11 : i64} {
  func.func @_decoder_kernel(%arg0: i32, %arg1: i32, %arg2: memref<8x32xf32, #tpu.memory_space<vmem>>, %arg3: memref<32x128xf32, #tpu.memory_space<vmem>>, %arg4: memref<1x128xf32, #tpu.memory_space<vmem>>, %arg5: memref<8x128xf32, #tpu.memory_space<vmem>>) attributes {dimension_semantics = [#tpu.dimension_semantics<parallel>, #tpu.dimension_semantics<parallel>], iteration_bounds = array<i64: 1, 2>, scalar_prefetch = 0 : i64, scratch_operands = 0 : i64, tpu.core_type = #tpu.core_type<tc>, window_params = [{transform_indices = @transform_0, window_bounds = array<i64: 8, 32>}, {transform_indices = @transform_1, window_bounds = array<i64: 32, 128>}, {transform_indices = @transform_2, window_bounds = array<i64: 1, 128>}, {transform_indices = @transform_3, window_bounds = array<i64: 8, 128>}]} {
    %c0 = arith.constant 0 : index
    %c0_0 = arith.constant 0 : index
    %0 = vector.load %arg2[%c0, %c0_0] : memref<8x32xf32, #tpu.memory_space<vmem>>, vector<8x32xf32>
    %c0_1 = arith.constant 0 : index
    %c0_2 = arith.constant 0 : index
    %1 = vector.load %arg3[%c0_1, %c0_2] : memref<32x128xf32, #tpu.memory_space<vmem>>, vector<32x128xf32>
    %cst = arith.constant dense<0.000000e+00> : vector<8x128xf32>
    %2 = tpu.matmul %0, %1, %cst {dimension_numbers = #tpu.dot_dimension_numbers<[1], [0], [0], [1], [0, 0, 1, 1], [], []>} : vector<8x32xf32>, vector<32x128xf32>, vector<8x128xf32> -> vector<8x128xf32>
    %c0_3 = arith.constant 0 : index
    %c0_4 = arith.constant 0 : index
    %3 = vector.load %arg4[%c0_3, %c0_4] : memref<1x128xf32, #tpu.memory_space<vmem>>, vector<1x128xf32>
    %4 = vector.broadcast %3 : vector<1x128xf32> to vector<8x128xf32>
    %5 = arith.addf %2, %4 : vector<8x128xf32>
    %c0_5 = arith.constant 0 : index
    %c0_6 = arith.constant 0 : index
    %6 = vector.load %arg5[%c0_5, %c0_6] : memref<8x128xf32, #tpu.memory_space<vmem>>, vector<8x128xf32>
    tpu.vector_store %arg5[%c0_5, %c0_6], %5 {strides = array<i32>} : memref<8x128xf32, #tpu.memory_space<vmem>>, vector<8x128xf32>,
    return
  }
  func.func @transform_0(%arg0: i32, %arg1: i32) -> (i32, i32) {
    %c0_i32 = arith.constant 0 : i32
    %c0_i32_0 = arith.constant 0 : i32
    return %arg0, %c0_i32 : i32, i32
  }
  func.func @transform_1(%arg0: i32, %arg1: i32) -> (i32, i32) {
    %c0_i32 = arith.constant 0 : i32
    %c0_i32_0 = arith.constant 0 : i32
    return %c0_i32, %arg1 : i32, i32
  }
  func.func @transform_2(%arg0: i32, %arg1: i32) -> (i32, i32) {
    %c0_i32 = arith.constant 0 : i32
    %c0_i32_0 = arith.constant 0 : i32
    return %c0_i32, %arg1 : i32, i32
  }
  func.func @transform_3(%arg0: i32, %arg1: i32) -> (i32, i32) {
    %c0_i32 = arith.constant 0 : i32
    return %arg0, %arg1 : i32, i32
  }
}

</mosaic_0001>

<llo_original>
// kernel: tpu_custom_call.1
$region0: #{tpu_custom_call.1}
  #allocation0 [shape = 'u32[]', space=smem, size = 0x4, offset = 0x4, fixed_abs, tag = 'smem constant byte address 0x4 - core index']
  #allocation1 [shape = 'u32[72,128]{1,0:T(1,128)}', space=vmem, size = 0x9000, scoped, tag = 'internal scratch']
  %s0 = inlined_call_operand.hbm [shape: f32[8,32], index: 0, kind: input, shape index: {}]
  %s1 = inlined_call_operand.hbm [shape: f32[32,256], index: 1, kind: input, shape index: {}]
  %s2 = inlined_call_operand.hbm [shape: f32[1,256], index: 2, kind: input, shape index: {}]
  %s3 = inlined_call_operand.hbm [shape: f32[8,256], index: 3, kind: output, shape index: {}]
  %s4 = sld [smem:[#allocation0]]
  $region57: #{tpu_custom_call.1} parent=0
    _
  %s6 = ssub.s32 1, %s4
  %s7 = scalar_select 0, %s6, %s4
  $region1: #{tpu_custom_call.1} parent=0
    #allocation2 [shape = 'u8[4096]{0}', space=vmem, size = 0x1000, scoped, tag = 'input window, operand 0, single buffered']
    #allocation3 [shape = 's32[2]{0}', space=sflag, size = 0x8, scoped, tag = 'scoped memory for tpu_custom_call.1']
    #allocation4 [shape = 's32[2]{0}', space=sflag, size = 0x8, scoped, tag = 'scoped memory for tpu_custom_call.1']
    #allocation5 [shape = 'u8[32768]{0}', space=vmem, size = 0x8000, scoped, tag = 'input window, operand 1']
    #allocation6 [shape = 's32[2]{0}', space=sflag, size = 0x8, scoped, tag = 'scoped memory for tpu_custom_call.1']
    #allocation7 [shape = 'u8[1024]{0}', space=vmem, size = 0x400, scoped, tag = 'input window, operand 2']
    #allocation8 [shape = 'u8[8192]{0}', space=vmem, size = 0x2000, scoped, tag = 'output window, operand 0']
    %8 = vsyncpa [#allocation3], 0
    %9 = vsyncpa [#allocation6], 0
    %s10 = scalar_lea.sflag [#allocation6], 1
    %11 = vsyncpa %s10, 0
    %12 = vsyncpa [#allocation4], 0
    %s13 = scalar_lea.sflag [#allocation4], 1
    %14 = vsyncpa %s13, 0
    loop: start=0, step=1, limit=4
    $region2: #{tpu_custom_call.1} parent=1 // loop_pre_header
      _
    $region3: #{tpu_custom_call.1} parent=1 // loop_header
      %s16 = sphi 0, %s20
      %p17 = scmp.ge.s32.totalorder %s16, 4
      %s23 = sphi 0, %s35
      %s24 = sphi 0, %s31
      %s25 = sphi 0, %s23
      %s26 = sphi 0, %s24
      %s27 = sphi 0, %s25
      %s28 = sphi 0, %s26
      %s38 = sphi 0, %s40
      %s41 = sphi 0, %s38
      %s42 = sphi 0, %s41
      %s58 = sphi 0, %s42
      %s64 = sphi 0, %s66
      %s67 = sphi 0, %s64
      %s68 = sphi 0, %s67
      %s84 = sphi 0, %s68
      %s90 = sphi 0, %s92
      %s93 = sphi 0, %s90
      %s94 = sphi 0, %s93
      %s110 = sphi 0, %s94
      %s118 = sphi 0, %s120
      %s121 = sphi 0, %s118
      %s122 = sphi 0, %s121
      %s138 = sphi 0, %s122
    $region4: #{tpu_custom_call.1} parent=1 // loop_header_branch
      %19 = sbr.rel (%p17) target = $region8
    $region5: #{tpu_custom_call.1} parent=1 // loop_body
      %s21 = ssub.s32 %s16, 1
      %s22 = ssub.s32 %s16, 2
      %s29 = sadd.s32 1, %s24
      %p30 = scmp.ge.s32.totalorder %s29, 2
      %s31 = scalar_select %p30, 0, %s29
      %s32 = sadd.s32 1, %s23
      %s33 = scalar_select %p30, %s32, %s23
      %p34 = scmp.ge.s32.totalorder %s33, 1
      %s35 = scalar_select %p34, 0, %s33
      %s36 = ssub.s32 %s23, %s35
      %p37 = scmp.eq.s32.totalorder %s36, 0
      %s39 = sadd.s32 %s38, 1
      %s40 = scalar_select %p37, %s38, %s39
      %p43 = pneg %p37
      %p44 = scmp.eq.s32.totalorder %s16, 1
      %p45 = por %p43, %p44
      %p46 = scmp.ne.s32.totalorder %s38, %s41
      %p47 = scmp.eq.s32.totalorder %s16, 0
      %p48 = por %p46, %p47
      %p49 = scmp.ne.s32.totalorder %s38, %s41
      %p50 = scmp.eq.s32.totalorder %s21, 1
      %p51 = por %p49, %p50
      %p52 = scmp.ne.s32.totalorder %s41, %s42
      %p53 = scmp.eq.s32.totalorder %s21, 0
      %p54 = por %p52, %p53
      %p55 = scmp.ne.s32.totalorder %s41, %s42
      %p56 = scmp.eq.s32.totalorder %s22, 1
      %p57 = por %p55, %p56
      %p59 = scmp.ne.s32.totalorder %s42, %s58
      %p60 = scmp.eq.s32.totalorder %s22, 0
      %p61 = por %p59, %p60
      %s62 = ssub.s32 %s24, %s31
      %p63 = scmp.eq.s32.totalorder %s62, 0
      %s65 = sadd.s32 %s64, 1
      %s66 = scalar_select %p63, %s64, %s65
      %p69 = pneg %p63
      %p70 = scmp.eq.s32.totalorder %s16, 1
      %p71 = por %p69, %p70
      %p72 = scmp.ne.s32.totalorder %s64, %s67
      %p73 = scmp.eq.s32.totalorder %s16, 0
      %p74 = por %p72, %p73
      %p75 = scmp.ne.s32.totalorder %s64, %s67
      %p76 = scmp.eq.s32.totalorder %s21, 1
      %p77 = por %p75, %p76
      %p78 = scmp.ne.s32.totalorder %s67, %s68
      %p79 = scmp.eq.s32.totalorder %s21, 0
      %p80 = por %p78, %p79
      %p81 = scmp.ne.s32.totalorder %s67, %s68
      %p82 = scmp.eq.s32.totalorder %s22, 1
      %p83 = por %p81, %p82
      %p85 = scmp.ne.s32.totalorder %s68, %s84
      %p86 = scmp.eq.s32.totalorder %s22, 0
      %p87 = por %p85, %p86
      %s88 = ssub.s32 %s24, %s31
      %p89 = scmp.eq.s32.totalorder %s88, 0
      %s91 = sadd.s32 %s90, 1
      %s92 = scalar_select %p89, %s90, %s91
      %p95 = pneg %p89
      %p96 = scmp.eq.s32.totalorder %s16, 1
      %p97 = por %p95, %p96
      %p98 = scmp.ne.s32.totalorder %s90, %s93
      %p99 = scmp.eq.s32.totalorder %s16, 0
      %p100 = por %p98, %p99
      %p101 = scmp.ne.s32.totalorder %s90, %s93
      %p102 = scmp.eq.s32.totalorder %s21, 1
      %p103 = por %p101, %p102
      %p104 = scmp.ne.s32.totalorder %s93, %s94
      %p105 = scmp.eq.s32.totalorder %s21, 0
      %p106 = por %p104, %p105
      %p107 = scmp.ne.s32.totalorder %s93, %s94
      %p108 = scmp.eq.s32.totalorder %s22, 1
      %p109 = por %p107, %p108
      %p111 = scmp.ne.s32.totalorder %s94, %s110
      %p112 = scmp.eq.s32.totalorder %s22, 0
      %p113 = por %p111, %p112
      %s114 = ssub.s32 %s23, %s35
      %s115 = ssub.s32 %s24, %s31
      %s116 = sor.u32 %s114, %s115
      %p117 = scmp.eq.s32.totalorder %s116, 0
      %s119 = sadd.s32 %s118, 1
      %s120 = scalar_select %p117, %s118, %s119
      %p123 = pneg %p117
      %p124 = scmp.eq.s32.totalorder %s16, 1
      %p125 = por %p123, %p124
      %p126 = scmp.ne.s32.totalorder %s118, %s121
      %p127 = scmp.eq.s32.totalorder %s16, 0
      %p128 = por %p126, %p127
      %p129 = scmp.ne.s32.totalorder %s118, %s121
      %p130 = scmp.eq.s32.totalorder %s21, 1
      %p131 = por %p129, %p130
      %p132 = scmp.ne.s32.totalorder %s121, %s122
      %p133 = scmp.eq.s32.totalorder %s21, 0
      %p134 = por %p132, %p133
      %p135 = scmp.ne.s32.totalorder %s121, %s122
      %p136 = scmp.eq.s32.totalorder %s22, 1
      %p137 = por %p135, %p136
      %p139 = scmp.ne.s32.totalorder %s122, %s138
      %p140 = scmp.eq.s32.totalorder %s22, 0
      %p141 = por %p139, %p140
      %p142 = scmp.le.s32.totalorder 1, %s16
      %p143 = scmp.lt.s32.totalorder %s16, 3
      %p144 = pnand %p142, %p143
      %p145 = pneg %p144
      // Predicated region
      $region9: #{tpu_custom_call.1} parent=5 // pred_check
        _
      $region10: #{tpu_custom_call.1} parent=5 // pred_check_branch
        %147 = sbr.rel (%p144) target = $region12
      $region11: #{tpu_custom_call.1} parent=5 // pred_region
        %s148 = ssub.s32 %s16, 1
        // Predicated region
        $region13: #{tpu_custom_call.1} parent=11 // pred_check
          %p149 = pneg %p54
        $region14: #{tpu_custom_call.1} parent=11 // pred_check_branch
          %151 = sbr.rel (%p149) target = $region16
        $region15: #{tpu_custom_call.1} parent=11 // pred_region
          %153 = vsyncadd [#allocation3], 0
          %s154 = smul.addr %s25, 8
          %s155 = scalar_lea.hbm %s0, %s154
          %s157 = sshll.u32 %s155, 4
          %s158 = int_to_ptr.hbm [resolvable:$true] %s157
          %s159 = sshll.u32 [#allocation2], 4
          %s160 = int_to_ptr.vmem [resolvable:$true] %s159
          %162 = dma.hbm_to_vmem [thread:$0]  %s158, 128, %s160, [#allocation3]
        $region16: #{tpu_custom_call.1} parent=11 // pred_fallthru
          _
      $region12: #{tpu_custom_call.1} parent=5 // pred_fallthru
        _
      %p163 = scmp.lt.s32.totalorder %s16, 2
      // Predicated region
      $region17: #{tpu_custom_call.1} parent=5 // pred_check
        %p164 = pneg %p163
      $region18: #{tpu_custom_call.1} parent=5 // pred_check_branch
        %166 = sbr.rel (%p164) target = $region20
      $region19: #{tpu_custom_call.1} parent=5 // pred_region
        // Predicated region
        $region21: #{tpu_custom_call.1} parent=19 // pred_check
          %p167 = pneg %p74
        $region22: #{tpu_custom_call.1} parent=19 // pred_check_branch
          %169 = sbr.rel (%p167) target = $region24
        $region23: #{tpu_custom_call.1} parent=19 // pred_region
          %s170 = sand.u32 %s16, 1
          %s171 = scalar_lea.sflag [#allocation6], %s170
          %s172 = sand.u32 %s64, 1
          %s173 = smul.addr %s172, 32
          %s174 = scalar_lea.vmem [#allocation5], %s173
          %176 = vsyncadd %s171, 0
          %s177 = smul.addr %s24, 8
          %s178 = scalar_lea.hbm %s1, %s177
          %s179 = sshll.u32 %s178, 4
          %s180 = int_to_ptr.hbm [resolvable:$true] %s179
          %s181 = sshll.u32 %s174, 4
          %s182 = int_to_ptr.vmem [resolvable:$true] %s181
          %187 = dma.hbm_to_vmem [thread:$0]  %s180, 512, %s182, %s171, 256, 128, 8
        $region24: #{tpu_custom_call.1} parent=19 // pred_fallthru
          _
        // Predicated region
        $region25: #{tpu_custom_call.1} parent=19 // pred_check
          %p188 = pneg %p100
        $region26: #{tpu_custom_call.1} parent=19 // pred_check_branch
          %190 = sbr.rel (%p188) target = $region28
        $region27: #{tpu_custom_call.1} parent=19 // pred_region
          %s191 = sand.u32 %s16, 1
          %s192 = scalar_lea.sflag [#allocation6], %s191
          %s193 = sand.u32 %s90, 1
          %s194 = scalar_lea.vmem [#allocation7], %s193
          %196 = vsyncadd %s192, 0
          %s197 = scalar_lea.hbm %s2, %s24
          %s199 = sshll.u32 %s197, 4
          %s200 = int_to_ptr.hbm [resolvable:$true] %s199
          %s201 = sshll.u32 %s194, 4
          %s202 = int_to_ptr.vmem [resolvable:$true] %s201
          %204 = dma.hbm_to_vmem [thread:$0]  %s200, 16, %s202, %s192
        $region28: #{tpu_custom_call.1} parent=19 // pred_fallthru
          _
      $region20: #{tpu_custom_call.1} parent=5 // pred_fallthru
        _
      %p205 = scmp.le.s32.totalorder 1, %s16
      %p206 = scmp.lt.s32.totalorder %s16, 3
      %p207 = pnand %p205, %p206
      %p208 = pneg %p207
      // Predicated region
      $region29: #{tpu_custom_call.1} parent=5 // pred_check
        _
      $region30: #{tpu_custom_call.1} parent=5 // pred_check_branch
        %210 = sbr.rel (%p207) target = $region32
      $region31: #{tpu_custom_call.1} parent=5 // pred_region
        %s211 = ssub.s32 %s16, 1
        // Predicated region
        $region33: #{tpu_custom_call.1} parent=31 // pred_check
          %p212 = pneg %p54
        $region34: #{tpu_custom_call.1} parent=31 // pred_check_branch
          %214 = sbr.rel (%p212) target = $region36
        $region35: #{tpu_custom_call.1} parent=31 // pred_region
          %216 = dma.done [#allocation3], 128
        $region36: #{tpu_custom_call.1} parent=31 // pred_fallthru
          _
        %s217 = sand.u32 %s21, 1
        %s218 = scalar_lea.sflag [#allocation6], %s217
        %s219 = sand.u32 %s67, 1
        %s220 = smul.addr %s219, 32
        %s221 = scalar_lea.vmem [#allocation5], %s220
        // Predicated region
        $region37: #{tpu_custom_call.1} parent=31 // pred_check
          %p222 = pneg %p80
        $region38: #{tpu_custom_call.1} parent=31 // pred_check_branch
          %224 = sbr.rel (%p222) target = $region40
        $region39: #{tpu_custom_call.1} parent=31 // pred_region
          %226 = dma.done %s218, 512
        $region40: #{tpu_custom_call.1} parent=31 // pred_fallthru
          _
        %s227 = sand.u32 %s21, 1
        %s228 = scalar_lea.sflag [#allocation6], %s227
        %s229 = sand.u32 %s93, 1
        %s230 = scalar_lea.vmem [#allocation7], %s229
        // Predicated region
        $region41: #{tpu_custom_call.1} parent=31 // pred_check
          %p231 = pneg %p106
        $region42: #{tpu_custom_call.1} parent=31 // pred_check_branch
          %233 = sbr.rel (%p231) target = $region44
        $region43: #{tpu_custom_call.1} parent=31 // pred_region
          %235 = dma.done %s228, 16
        $region44: #{tpu_custom_call.1} parent=31 // pred_fallthru
          _
        %p236 = pneg %p54
        %p237 = pneg %p51
        %s238 = sand.u32 %s21, 1
        %s239 = scalar_lea.sflag [#allocation6], %s238
        %s240 = sand.u32 %s67, 1
        %s241 = smul.addr %s240, 32
        %s242 = scalar_lea.vmem [#allocation5], %s241
        %p243 = pneg %p80
        %p244 = pneg %p77
        %s245 = sand.u32 %s21, 1
        %s246 = scalar_lea.sflag [#allocation6], %s245
        %s247 = sand.u32 %s93, 1
        %s248 = scalar_lea.vmem [#allocation7], %s247
        %p249 = pneg %p106
        %p250 = pneg %p103
        %p251 = pneg %p134
        %p252 = pneg %p131
        %s253 = sand.u32 %s121, 1
        %s254 = scalar_lea.sflag [#allocation4], %s253
        %s255 = sand.u32 %s121, 1
        %s256 = smul.addr %s255, 8
        %s257 = scalar_lea.vmem [#allocation8], %s256
        %v258 = vld [vmem:[#allocation2] sm:$0xff]
        %v259 = vld [vmem:[%s221] sm:$0xff]
        %v260 = vld [vmem:[%s221 + $0x8] sm:$0xff]
        %v261 = vld [vmem:[%s221 + $0x10] sm:$0xff]
        %v262 = vld [vmem:[%s221 + $0x18] sm:$0xff]
        %v263 = vld [vmem:[%s230] sm:$0x1]
        %v265 = vperm.slane %v263, 0
        %vm267 = vcmask 261120
        %v269 = vsel %vm267, %v258, 0
        %271 = vmatpush.msra.mxu0 0.0
        %272 = vmatpush.msra.mxu0 0.0
        %273 = vmatpush.msra.mxu0 0.0
        %274 = vmatpush.msra.mxu0 0.0
        %275 = vmatpush.msra.mxu0 0.0
        %276 = vmatpush.msra.mxu0 0.0
        %277 = vmatpush.msra.mxu0 0.0
        %278 = vmatpush.msra.mxu0 0.0
        %279 = vmatpush.msra.mxu0 0.0
        %280 = vmatpush.msra.mxu0 0.0
        %281 = vmatpush.msra.mxu0 0.0
        %282 = vmatpush.msra.mxu0 0.0
        %283 = vmatpush.msra.mxu0 %v262
        %284 = vmatpush.msra.mxu0 %v261
        %285 = vmatpush.msra.mxu0 %v260
        %286 = vmatpush.msra.mxu0 %v259
        %287 = vmatmul.f32.gmra.mxu0 %v269
        %v288 = vpop.f32.mrf.mxu0
        %v289 = vadd.f32 %v265, %v288
        %290 = vdwg.mxu0
        %291 = vst [vmem:[%s257] sm:$0xff] %v289
        %s292 = sand.u32 %s121, 1
        %s293 = scalar_lea.sflag [#allocation4], %s292
        %s294 = sand.u32 %s121, 1
        %s295 = smul.addr %s294, 8
        %s296 = scalar_lea.vmem [#allocation8], %s295
        // Predicated region
        $region45: #{tpu_custom_call.1} parent=31 // pred_check
          %p297 = pneg %p131
        $region46: #{tpu_custom_call.1} parent=31 // pred_check_branch
          %299 = sbr.rel (%p297) target = $region48
        $region47: #{tpu_custom_call.1} parent=31 // pred_region
          %301 = vsyncadd %s293, 0
          %s302 = smul.addr %s25, 2
          %s303 = sadd.s32 %s26, %s302
          %s304 = smul.addr %s303, 8
          %s305 = scalar_lea.hbm %s3, %s304
          %s307 = sshll.u32 %s296, 4
          %s308 = int_to_ptr.vmem [resolvable:$true] %s307
          %s309 = sshll.u32 %s305, 4
          %s310 = int_to_ptr.hbm [resolvable:$true] %s309
          %312 = dma.vmem_to_hbm [thread:$0]  %s308, 128, %s310, %s293
        $region48: #{tpu_custom_call.1} parent=31 // pred_fallthru
          _
      $region32: #{tpu_custom_call.1} parent=5 // pred_fallthru
        _
      %p313 = scmp.le.s32.totalorder 2, %s16
      // Predicated region
      $region49: #{tpu_custom_call.1} parent=5 // pred_check
        %p314 = pneg %p313
      $region50: #{tpu_custom_call.1} parent=5 // pred_check_branch
        %316 = sbr.rel (%p314) target = $region52
      $region51: #{tpu_custom_call.1} parent=5 // pred_region
        %s317 = ssub.s32 %s16, 2
        // Predicated region
        $region53: #{tpu_custom_call.1} parent=51 // pred_check
          %p318 = pneg %p137
        $region54: #{tpu_custom_call.1} parent=51 // pred_check_branch
          %320 = sbr.rel (%p318) target = $region56
        $region55: #{tpu_custom_call.1} parent=51 // pred_region
          %s321 = sand.u32 %s122, 1
          %s322 = scalar_lea.sflag [#allocation4], %s321
          %s323 = sand.u32 %s122, 1
          %s324 = smul.addr %s323, 8
          %s325 = scalar_lea.vmem [#allocation8], %s324
          %327 = dma.done %s322, 128
        $region56: #{tpu_custom_call.1} parent=51 // pred_fallthru
          _
      $region52: #{tpu_custom_call.1} parent=5 // pred_fallthru
        _
    $region6: #{tpu_custom_call.1} parent=1 // loop_footer
      %s20 = sadd.s32 1, %s16
    $region7: #{tpu_custom_call.1} parent=1 // loop_footer_branch
      %15 = sbr.rel target = $region3
    $region8: #{tpu_custom_call.1} parent=1 // loop_exit
      _
    %328 = vsyncpa [#allocation3], 1
    %s329 = scalar_lea.sflag [#allocation3], 1
    %330 = vsyncpa %s329, 1
    %331 = vsyncpa [#allocation6], 1
    %s332 = scalar_lea.sflag [#allocation6], 1
    %333 = vsyncpa %s332, 1
    %334 = vsyncpa [#allocation4], 1
    %s335 = scalar_lea.sflag [#allocation4], 1
    %336 = vsyncpa %s335, 1

</llo_original>
